<compile_context>
chip_gen: v7x
topology: tpu7x:2x2x1
jax: 0.10.0
libtpu: 0.0.40
codegen_flags: <defaults>
</compile_context>

<pallas_src>
from functools import partial

import jax
import jax.numpy as jnp
import numpy as np
from jax.experimental import pallas as pl
from jax.experimental.pallas import tpu as pltpu


# ----------------------------- Pallas kernel ---------------------------------

def _rope_kernel(x_ref, cos_ref, sin_ref, o_ref):
    x = x_ref[...].astype(jnp.float32)                      # (TILE_LF, DF)
    d = x.shape[-1]
    # jnp.roll semantics: roll(x, s)[j] = x[(j - s) % d]
    x_next = pltpu.roll(x, d - 1, 1)                        # x_next[:, j] = x[:, (j+1) % d]
    x_prev = pltpu.roll(x, 1, 1)                            # x_prev[:, j] = x[:, (j-1) % d]
    # Lane parity of the folded index equals parity of the in-row index (D even),
    # and the wrap lanes of each roll are never selected by the parity mask.
    lane = jax.lax.broadcasted_iota(jnp.int32, x.shape, 1)
    rot = jnp.where((lane % 2) == 0, x_next, x_prev)
    out = x * cos_ref[...].astype(jnp.float32) + rot * sin_ref[...].astype(jnp.float32)
    o_ref[...] = out.astype(o_ref.dtype)


# ------------------------- table construction (JAX) --------------------------

def _sin_cos_scale(length, offset, d_model, max_len, downscale):
    """Replicates the table construction done in the PyTorch forward()."""
    max_pos = length + offset
    d_half = d_model // 2
    # registered buffer: (arange(0, d_model, 2) + 0.4*d_model) / (1.4*d_model)
    scale_base = (jnp.arange(0, d_model, 2, dtype=jnp.float32) + 0.4 * d_model) / (1.4 * d_model)
    power = (jnp.arange(max_pos, dtype=jnp.float32) / max_len)[:, None]        # [max_pos, 1]
    scale = scale_base[None, :] ** power                                        # [max_pos, d/2]
    inv_freq = 1.0 / (10000.0 ** (jnp.arange(d_half, dtype=jnp.float32) / d_half))
    sinusoid = jnp.arange(max_pos, dtype=jnp.float32)[:, None] * inv_freq[None, :]
    sin = jnp.sin(sinusoid)
    cos = jnp.cos(sinusoid)
    if max_pos > length:
        scale = scale[-length:]
        sin = sin[-length:]
        cos = cos[-length:]
    if downscale:
        scale = 1.0 / scale
    # duplicate_interleave(t * scale): each column value repeated twice, interleaved.
    sin_d = jnp.repeat(sin * scale, 2, axis=-1)                                 # [L, D]
    cos_d = jnp.repeat(cos * scale, 2, axis=-1)                                 # [L, D]
    return sin_d, cos_d


# --------------------------------- wrapper ------------------------------------

@partial(jax.jit, static_argnames=("offset", "downscale", "max_len"))
def rotary_position_embedding(x, offset=0, downscale=False, max_len=512):
    B, L, D = x.shape
    assert D % 2 == 0, "d_model must be even for rotary embedding"

    sin_d, cos_d = _sin_cos_scale(L, offset, D, max_len, downscale)   # (L, D) f32
    lane = jnp.arange(D)
    is_even = (lane % 2) == 0
    sin_comb = jnp.where(is_even, -sin_d, sin_d)                      # single signed table

    # Table storage dtype: f32 for f32 activations (strict tolerance), else
    # narrow to activation dtype to halve table HBM traffic; kernel math is f32.
    tab_dtype = jnp.float32 if x.dtype == jnp.float32 else x.dtype
    sin_comb = sin_comb.astype(tab_dtype)
    cos_d = cos_d.astype(tab_dtype)

    # Lane-dense folding: pack groups of rows so the lane dim is a multiple of
    # 128; pad the seq axis if L is not divisible by the fold factor.
    fold = 1
    if D < 128 and (128 % D == 0):
        fold = 128 // D
    Lp = ((L + fold - 1) // fold) * fold
    pad = Lp - L
    if pad:
        x = jnp.pad(x, ((0, 0), (0, pad), (0, 0)))
        cos_d = jnp.pad(cos_d, ((0, pad), (0, 0)))
        sin_comb = jnp.pad(sin_comb, ((0, pad), (0, 0)))
    LF, DF = Lp // fold, D * fold

    x_f = x.reshape(B, LF, DF)
    cos_f = cos_d.reshape(LF, DF)
    sin_f = sin_comb.reshape(LF, DF)

    # Tile the (folded) sequence axis: dtype-aware sublane multiple + cdiv grid,
    # VMEM budget sized so even v7x (64 MiB / TC) has plenty of headroom.
    x_item = jnp.dtype(x.dtype).itemsize
    tab_item = jnp.dtype(tab_dtype).itemsize
    sub = {1: 32, 2: 16}.get(x_item, 8)
    # double-buffered x in + out (x dtype) + double-buffered cos & sin tables.
    bytes_per_row = DF * (4 * x_item + 4 * tab_item)
    budget = 16 * 1024 * 1024
    cap = max(sub, budget // max(1, bytes_per_row))
    tile_lf = min(LF, 1024, cap)
    if B == 1 and LF >= 2 * sub:
        tile_lf = min(tile_lf, LF // 2)        # keep >= 2 seq tiles for v7x dual-TC
    if tile_lf < LF:
        tile_lf = max(sub, (tile_lf // sub) * sub)   # sublane-aligned; cdiv handles remainder
    grid_l = pl.cdiv(LF, tile_lf)

    # Grid: (seq_tiles, batch) — batch innermost so table blocks are reused
    # (not re-DMA'd) across batch elements.
    grid = (grid_l, B)
    out = pl.pallas_call(
        _rope_kernel,
        out_shape=jax.ShapeDtypeStruct((B, LF, DF), x.dtype),
        grid=grid,
        in_specs=[
            pl.BlockSpec((None, tile_lf, DF), lambda l, b: (b, l, 0)),  # x (batch dim squeezed)
            pl.BlockSpec((tile_lf, DF), lambda l, b: (l, 0)),           # cos table
            pl.BlockSpec((tile_lf, DF), lambda l, b: (l, 0)),           # signed sin table
        ],
        out_specs=pl.BlockSpec((None, tile_lf, DF), lambda l, b: (b, l, 0)),
        compiler_params=pltpu.CompilerParams(
            dimension_semantics=("parallel", "parallel"),
            vmem_limit_bytes=32 * 1024 * 1024,
        ),
    )(x_f, cos_f, sin_f)

    out = out.reshape(B, Lp, D)
    if pad:
        out = out[:, :L, :]
    return out


# ---------------- pure-JAX reference (mirrors the PyTorch code) ----------------

def _rotate_every_two_ref(x):
    x1 = x[:, :, ::2]
    x2 = x[:, :, 1::2]
    return jnp.stack((-x2, x1), axis=-1).reshape(x.shape)


def _reference(x, offset=0, downscale=False, max_len=512):
    _, L, D = x.shape
    sin_d, cos_d = _sin_cos_scale(L, offset, D, max_len, downscale)
    return x * cos_d + _rotate_every_two_ref(x) * sin_d


if __name__ == "__main__":
    key = jax.random.PRNGKey(0)
    B, L, D = 2, 8, 64          # batch, seq_len, d_model (module default d_model=64)
    x = jax.random.normal(key, (B, L, D), dtype=jnp.float32)

    out = rotary_position_embedding(x, offset=0, downscale=False, max_len=512)
    out = jax.block_until_ready(out)
    ref = _reference(x, offset=0, downscale=False, max_len=512)
    assert out.shape == x.shape and out.dtype == x.dtype
    np.testing.assert_allclose(np.asarray(out), np.asarray(ref), rtol=1e-5, atol=1e-5)

    # exercise the offset / downscale (xPos) path as well
    out2 = jax.block_until_ready(
        rotary_position_embedding(x, offset=3, downscale=True, max_len=512))
    ref2 = _reference(x, offset=3, downscale=True, max_len=512)
    np.testing.assert_allclose(np.asarray(out2), np.asarray(ref2), rtol=1e-5, atol=1e-5)

    # exercise the seq-padding path (L not divisible by the fold factor)
    key2 = jax.random.PRNGKey(1)
    x3 = jax.random.normal(key2, (1, 9, 64), dtype=jnp.float32)
    out3 = jax.block_until_ready(rotary_position_embedding(x3))
    ref3 = _reference(x3)
    np.testing.assert_allclose(np.asarray(out3), np.asarray(ref3), rtol=1e-5, atol=1e-5)

    print("KERNEL_OK")
</pallas_src>

<mosaic_0001>
module attributes {stable_mosaic.version = 11 : i64} {
  func.func @_rope_kernel(%arg0: i32, %arg1: i32, %arg2: memref<1x4x128xf32, #tpu.memory_space<vmem>>, %arg3: memref<4x128xf32, #tpu.memory_space<vmem>>, %arg4: memref<4x128xf32, #tpu.memory_space<vmem>>, %arg5: memref<1x4x128xf32, #tpu.memory_space<vmem>>) attributes {dimension_semantics = [#tpu.dimension_semantics<parallel>, #tpu.dimension_semantics<parallel>], iteration_bounds = array<i64: 1, 2>, scalar_prefetch = 0 : i64, scratch_operands = 0 : i64, tpu.core_type = #tpu.core_type<tc>, window_params = [{transform_indices = @transform_0, window_bounds = array<i64: 1, 4, 128>}, {transform_indices = @transform_1, window_bounds = array<i64: 4, 128>}, {transform_indices = @transform_2, window_bounds = array<i64: 4, 128>}, {transform_indices = @transform_3, window_bounds = array<i64: 1, 4, 128>}]} {
    %c0 = arith.constant 0 : index
    %c0_0 = arith.constant 0 : index
    %c0_1 = arith.constant 0 : index
    %0 = vector.load %arg2[%c0, %c0_0, %c0_1] : memref<1x4x128xf32, #tpu.memory_space<vmem>>, vector<1x4x128xf32>
    %1 = vector.shape_cast %0 : vector<1x4x128xf32> to vector<4x128xf32>
    %c127_i32 = arith.constant 127 : i32
    %2 = tpu.dynamic_rotate %1 by %c127_i32 dim 1 : vector<4x128xf32>, i32 -> vector<4x128xf32>
    %c1_i32 = arith.constant 1 : i32
    %3 = tpu.dynamic_rotate %1 by %c1_i32 dim 1 : vector<4x128xf32>, i32 -> vector<4x128xf32>
    %4 = tpu.iota {dimensions = array<i32: 1>} : vector<4x128xi32>
    %c2_i32 = arith.constant 2 : i32
    %c0_i32 = arith.constant 0 : i32
    %5 = arith.cmpi eq, %c2_i32, %c0_i32 : i32
    %c1_i32_2 = arith.constant 1 : i32
    %6 = arith.select %5, %c1_i32_2, %c2_i32 : i32
    %7 = vector.broadcast %6 : i32 to vector<4x128xi32>
    %8 = arith.remsi %4, %7 : vector<4x128xi32>
    %c0_i32_3 = arith.constant 0 : i32
    %9 = vector.broadcast %c0_i32_3 : i32 to vector<4x128xi32>
    %10 = arith.cmpi ne, %8, %9 : vector<4x128xi32>
    %c0_i32_4 = arith.constant 0 : i32
    %11 = vector.broadcast %c0_i32_4 : i32 to vector<4x128xi32>
    %12 = arith.cmpi slt, %8, %11 : vector<4x128xi32>
    %c0_i32_5 = arith.constant 0 : i32
    %13 = arith.cmpi slt, %6, %c0_i32_5 : i32
    %14 = vector.broadcast %13 : i1 to vector<4x128xi1>
    %15 = vector.broadcast %14 : vector<4x128xi1> to vector<4x128xi1>
    %16 = arith.xori %12, %15 : vector<4x128xi1>
    %17 = arith.andi %16, %10 : vector<4x128xi1>
    %18 = vector.broadcast %6 : i32 to vector<4x128xi32>
    %19 = arith.addi %8, %18 : vector<4x128xi32>
    %20 = arith.select %17, %19, %8 : vector<4x128xi1>, vector<4x128xi32>
    %c0_i32_6 = arith.constant 0 : i32
    %21 = vector.broadcast %c0_i32_6 : i32 to vector<4x128xi32>
    %22 = arith.cmpi eq, %20, %21 : vector<4x128xi32>
    %23 = arith.select %22, %2, %3 : vector<4x128xi1>, vector<4x128xf32>
    %c0_7 = arith.constant 0 : index
    %c0_8 = arith.constant 0 : index
    %24 = vector.load %arg3[%c0_7, %c0_8] : memref<4x128xf32, #tpu.memory_space<vmem>>, vector<4x128xf32>
    %25 = arith.mulf %1, %24 : vector<4x128xf32>
    %c0_9 = arith.constant 0 : index
    %c0_10 = arith.constant 0 : index
    %26 = vector.load %arg4[%c0_9, %c0_10] : memref<4x128xf32, #tpu.memory_space<vmem>>, vector<4x128xf32>
    %27 = arith.mulf %23, %26 : vector<4x128xf32>
    %28 = arith.addf %25, %27 : vector<4x128xf32>
    %c0_11 = arith.constant 0 : index
    %c0_12 = arith.constant 0 : index
    %c0_13 = arith.constant 0 : index
    %29 = vector.load %arg5[%c0_11, %c0_12, %c0_13] : memref<1x4x128xf32, #tpu.memory_space<vmem>>, vector<1x4x128xf32>
    %30 = vector.shape_cast %29 : vector<1x4x128xf32> to vector<4x128xf32>
    %31 = vector.shape_cast %28 : vector<4x128xf32> to vector<1x4x128xf32>
    tpu.vector_store %arg5[%c0_11, %c0_12, %c0_13], %31 {strides = array<i32>} : memref<1x4x128xf32, #tpu.memory_space<vmem>>, vector<1x4x128xf32>,
    return
  }
  func.func @transform_0(%arg0: i32, %arg1: i32) -> (i32, i32, i32) {
    %c0_i32 = arith.constant 0 : i32
    %c0_i32_0 = arith.constant 0 : i32
    return %arg1, %arg0, %c0_i32 : i32, i32, i32
  }
  func.func @transform_1(%arg0: i32, %arg1: i32) -> (i32, i32) {
    %c0_i32 = arith.constant 0 : i32
    %c0_i32_0 = arith.constant 0 : i32
    return %arg0, %c0_i32 : i32, i32
  }
  func.func @transform_2(%arg0: i32, %arg1: i32) -> (i32, i32) {
    %c0_i32 = arith.constant 0 : i32
    %c0_i32_0 = arith.constant 0 : i32
    return %arg0, %c0_i32 : i32, i32
  }
  func.func @transform_3(%arg0: i32, %arg1: i32) -> (i32, i32, i32) {
    %c0_i32 = arith.constant 0 : i32
    %c0_i32_0 = arith.constant 0 : i32
    return %arg1, %arg0, %c0_i32 : i32, i32, i32
  }
}

</mosaic_0001>

<llo_original>
// kernel: rotary_position_embedding.1
$region0: #{rotary_position_embedding.1}
  #allocation0 [shape = 'u32[]', space=smem, size = 0x4, offset = 0x4, fixed_abs, tag = 'smem constant byte address 0x4 - core index']
  #allocation1 [shape = 'u32[144,128]{1,0:T(1,128)}', space=vmem, size = 0x12000, scoped, tag = 'internal scratch']
  %s0 = inlined_call_operand.vmem [shape: f32[2,4,128], index: 0, kind: input, shape index: {}]
  %s1 = inlined_call_operand.vmem [shape: f32[4,128], index: 1, kind: input, shape index: {}]
  %s2 = inlined_call_operand.vmem [shape: f32[4,128], index: 2, kind: input, shape index: {}]
  %s3 = inlined_call_operand.vmem [shape: f32[2,4,128], index: 3, kind: output, shape index: {}]
  %s4 = sld [smem:[#allocation0]]
  $region45: #{rotary_position_embedding.1} parent=0
    _
  %s6 = ssub.s32 1, %s4
  %s7 = scalar_select 0, %s6, %s4
  loop: start=0, step=1, limit=4
  $region2: #{rotary_position_embedding.1} parent=0 // loop_pre_header
    _
  $region3: #{rotary_position_embedding.1} parent=0 // loop_header
    %s9 = sphi 0, %s13
    %p10 = scmp.ge.s32.totalorder %s9, 4
    %s16 = sphi 0, %s28
    %s17 = sphi 0, %s24
    %s18 = sphi 0, %s16
    %s19 = sphi 0, %s17
    %s20 = sphi 0, %s18
    %s21 = sphi 0, %s19
    %s33 = sphi 0, %s35
    %s36 = sphi 0, %s33
    %s37 = sphi 0, %s36
    %s53 = sphi 0, %s37
    %s59 = sphi 0, %s61
    %s62 = sphi 0, %s59
    %s63 = sphi 0, %s62
    %s79 = sphi 0, %s63
    %s85 = sphi 0, %s87
    %s88 = sphi 0, %s85
    %s89 = sphi 0, %s88
    %s105 = sphi 0, %s89
    %s113 = sphi 0, %s115
    %s116 = sphi 0, %s113
    %s117 = sphi 0, %s116
    %s133 = sphi 0, %s117
  $region4: #{rotary_position_embedding.1} parent=0 // loop_header_branch
    %12 = sbr.rel (%p10) target = $region8
  $region5: #{rotary_position_embedding.1} parent=0 // loop_body
    %s14 = ssub.s32 %s9, 1
    %s15 = ssub.s32 %s9, 2
    %s22 = sadd.s32 1, %s17
    %p23 = scmp.ge.s32.totalorder %s22, 2
    %s24 = scalar_select %p23, 0, %s22
    %s25 = sadd.s32 1, %s16
    %s26 = scalar_select %p23, %s25, %s16
    %p27 = scmp.ge.s32.totalorder %s26, 1
    %s28 = scalar_select %p27, 0, %s26
    %s29 = ssub.s32 %s17, %s24
    %s30 = ssub.s32 %s16, %s28
    %s31 = sor.u32 %s29, %s30
    %p32 = scmp.eq.s32.totalorder %s31, 0
    %s34 = sadd.s32 %s33, 1
    %s35 = scalar_select %p32, %s33, %s34
    %p38 = pneg %p32
    %p39 = scmp.eq.s32.totalorder %s9, 1
    %p40 = por %p38, %p39
    %p41 = scmp.ne.s32.totalorder %s33, %s36
    %p42 = scmp.eq.s32.totalorder %s9, 0
    %p43 = por %p41, %p42
    %p44 = scmp.ne.s32.totalorder %s33, %s36
    %p45 = scmp.eq.s32.totalorder %s14, 1
    %p46 = por %p44, %p45
    %p47 = scmp.ne.s32.totalorder %s36, %s37
    %p48 = scmp.eq.s32.totalorder %s14, 0
    %p49 = por %p47, %p48
    %p50 = scmp.ne.s32.totalorder %s36, %s37
    %p51 = scmp.eq.s32.totalorder %s15, 1
    %p52 = por %p50, %p51
    %p54 = scmp.ne.s32.totalorder %s37, %s53
    %p55 = scmp.eq.s32.totalorder %s15, 0
    %p56 = por %p54, %p55
    %s57 = ssub.s32 %s16, %s28
    %p58 = scmp.eq.s32.totalorder %s57, 0
    %s60 = sadd.s32 %s59, 1
    %s61 = scalar_select %p58, %s59, %s60
    %p64 = pneg %p58
    %p65 = scmp.eq.s32.totalorder %s9, 1
    %p66 = por %p64, %p65
    %p67 = scmp.ne.s32.totalorder %s59, %s62
    %p68 = scmp.eq.s32.totalorder %s9, 0
    %p69 = por %p67, %p68
    %p70 = scmp.ne.s32.totalorder %s59, %s62
    %p71 = scmp.eq.s32.totalorder %s14, 1
    %p72 = por %p70, %p71
    %p73 = scmp.ne.s32.totalorder %s62, %s63
    %p74 = scmp.eq.s32.totalorder %s14, 0
    %p75 = por %p73, %p74
    %p76 = scmp.ne.s32.totalorder %s62, %s63
    %p77 = scmp.eq.s32.totalorder %s15, 1
    %p78 = por %p76, %p77
    %p80 = scmp.ne.s32.totalorder %s63, %s79
    %p81 = scmp.eq.s32.totalorder %s15, 0
    %p82 = por %p80, %p81
    %s83 = ssub.s32 %s16, %s28
    %p84 = scmp.eq.s32.totalorder %s83, 0
    %s86 = sadd.s32 %s85, 1
    %s87 = scalar_select %p84, %s85, %s86
    %p90 = pneg %p84
    %p91 = scmp.eq.s32.totalorder %s9, 1
    %p92 = por %p90, %p91
    %p93 = scmp.ne.s32.totalorder %s85, %s88
    %p94 = scmp.eq.s32.totalorder %s9, 0
    %p95 = por %p93, %p94
    %p96 = scmp.ne.s32.totalorder %s85, %s88
    %p97 = scmp.eq.s32.totalorder %s14, 1
    %p98 = por %p96, %p97
    %p99 = scmp.ne.s32.totalorder %s88, %s89
    %p100 = scmp.eq.s32.totalorder %s14, 0
    %p101 = por %p99, %p100
    %p102 = scmp.ne.s32.totalorder %s88, %s89
    %p103 = scmp.eq.s32.totalorder %s15, 1
    %p104 = por %p102, %p103
    %p106 = scmp.ne.s32.totalorder %s89, %s105
    %p107 = scmp.eq.s32.totalorder %s15, 0
    %p108 = por %p106, %p107
    %s109 = ssub.s32 %s17, %s24
    %s110 = ssub.s32 %s16, %s28
    %s111 = sor.u32 %s109, %s110
    %p112 = scmp.eq.s32.totalorder %s111, 0
    %s114 = sadd.s32 %s113, 1
    %s115 = scalar_select %p112, %s113, %s114
    %p118 = pneg %p112
    %p119 = scmp.eq.s32.totalorder %s9, 1
    %p120 = por %p118, %p119
    %p121 = scmp.ne.s32.totalorder %s113, %s116
    %p122 = scmp.eq.s32.totalorder %s9, 0
    %p123 = por %p121, %p122
    %p124 = scmp.ne.s32.totalorder %s113, %s116
    %p125 = scmp.eq.s32.totalorder %s14, 1
    %p126 = por %p124, %p125
    %p127 = scmp.ne.s32.totalorder %s116, %s117
    %p128 = scmp.eq.s32.totalorder %s14, 0
    %p129 = por %p127, %p128
    %p130 = scmp.ne.s32.totalorder %s116, %s117
    %p131 = scmp.eq.s32.totalorder %s15, 1
    %p132 = por %p130, %p131
    %p134 = scmp.ne.s32.totalorder %s117, %s133
    %p135 = scmp.eq.s32.totalorder %s15, 0
    %p136 = por %p134, %p135
    %p137 = scmp.le.s32.totalorder 1, %s9
    %p138 = scmp.lt.s32.totalorder %s9, 3
    %p139 = pnand %p137, %p138
    %p140 = pneg %p139
    // Predicated region
    $region9: #{rotary_position_embedding.1} parent=5 // pred_check
      _
    $region10: #{rotary_position_embedding.1} parent=5 // pred_check_branch
      %142 = sbr.rel (%p139) target = $region12
    $region11: #{rotary_position_embedding.1} parent=5 // pred_region
      %s143 = ssub.s32 %s9, 1
      // Predicated region
      $region13: #{rotary_position_embedding.1} parent=11 // pred_check
        %p144 = pneg %p75
      $region14: #{rotary_position_embedding.1} parent=11 // pred_check_branch
        %146 = sbr.rel (%p144) target = $region16
      $region15: #{rotary_position_embedding.1} parent=11 // pred_region
        %p147 = scmp.lt.s32.totalorder %s18, 0
        %s148 = scalar_select %p147, %s18, 0
        %s149 = smul.addr %s148, 4
        %s150 = scalar_lea.vmem %s1, %s149
      $region16: #{rotary_position_embedding.1} parent=11 // pred_fallthru
        _
      // Predicated region
      $region17: #{rotary_position_embedding.1} parent=11 // pred_check
        %p151 = pneg %p101
      $region18: #{rotary_position_embedding.1} parent=11 // pred_check_branch
        %153 = sbr.rel (%p151) target = $region20
      $region19: #{rotary_position_embedding.1} parent=11 // pred_region
        %p154 = scmp.lt.s32.totalorder %s18, 0
        %s155 = scalar_select %p154, %s18, 0
        %s156 = smul.addr %s155, 4
        %s157 = scalar_lea.vmem %s2, %s156
      $region20: #{rotary_position_embedding.1} parent=11 // pred_fallthru
        _
    $region12: #{rotary_position_embedding.1} parent=5 // pred_fallthru
      _
    %p158 = scmp.lt.s32.totalorder %s9, 2
    // Predicated region
    $region21: #{rotary_position_embedding.1} parent=5 // pred_check
      %p159 = pneg %p158
    $region22: #{rotary_position_embedding.1} parent=5 // pred_check_branch
      %161 = sbr.rel (%p159) target = $region24
    $region23: #{rotary_position_embedding.1} parent=5 // pred_region
      // Predicated region
      $region25: #{rotary_position_embedding.1} parent=23 // pred_check
        %p162 = pneg %p43
      $region26: #{rotary_position_embedding.1} parent=23 // pred_check_branch
        %164 = sbr.rel (%p162) target = $region28
      $region27: #{rotary_position_embedding.1} parent=23 // pred_region
        %p165 = scmp.lt.s32.totalorder %s17, 1
        %s166 = scalar_select %p165, %s17, 1
        %p167 = scmp.lt.s32.totalorder %s16, 0
        %s168 = scalar_select %p167, %s16, 0
        %s169 = sadd.s32 %s168, %s166
        %s170 = smul.addr %s169, 4
        %s171 = scalar_lea.vmem %s0, %s170
      $region28: #{rotary_position_embedding.1} parent=23 // pred_fallthru
        _
    $region24: #{rotary_position_embedding.1} parent=5 // pred_fallthru
      _
    %p172 = scmp.le.s32.totalorder 1, %s9
    %p173 = scmp.lt.s32.totalorder %s9, 3
    %p174 = pnand %p172, %p173
    %p175 = pneg %p174
    // Predicated region
    $region29: #{rotary_position_embedding.1} parent=5 // pred_check
      _
    $region30: #{rotary_position_embedding.1} parent=5 // pred_check_branch
      %177 = sbr.rel (%p174) target = $region32
    $region31: #{rotary_position_embedding.1} parent=5 // pred_region
      %s178 = ssub.s32 %s9, 1
      %p179 = scmp.lt.s32.totalorder %s19, 1
      %s180 = scalar_select %p179, %s19, 1
      %p181 = scmp.lt.s32.totalorder %s18, 0
      %s182 = scalar_select %p181, %s18, 0
      %s183 = sadd.s32 %s182, %s180
      %s184 = smul.addr %s183, 4
      %s185 = scalar_lea.vmem %s0, %s184
      %p186 = pneg %p49
      %p187 = pneg %p46
      %p188 = scmp.lt.s32.totalorder %s18, 0
      %s189 = scalar_select %p188, %s18, 0
      %s190 = smul.addr %s189, 4
      %s191 = scalar_lea.vmem %s1, %s190
      %p192 = pneg %p75
      %p193 = pneg %p72
      %p194 = scmp.lt.s32.totalorder %s18, 0
      %s195 = scalar_select %p194, %s18, 0
      %s196 = smul.addr %s195, 4
      %s197 = scalar_lea.vmem %s2, %s196
      %p198 = pneg %p101
      %p199 = pneg %p98
      %p200 = pneg %p129
      %p201 = pneg %p126
      %p202 = scmp.lt.s32.totalorder %s19, 1
      %s203 = scalar_select %p202, %s19, 1
      %p204 = scmp.lt.s32.totalorder %s18, 0
      %s205 = scalar_select %p204, %s18, 0
      %s206 = sadd.s32 %s205, %s203
      %s207 = smul.addr %s206, 4
      %s208 = scalar_lea.vmem %s3, %s207
      %p209 = scmp.lt.s32.totalorder %s19, 1
      %s210 = scalar_select %p209, %s19, 1
      %p211 = scmp.lt.s32.totalorder %s18, 0
      %s212 = scalar_select %p211, %s18, 0
      %s213 = sadd.s32 %s212, %s210
      %s214 = smul.addr %s213, 4
      %s215 = scalar_lea.vmem %s0, %s214
      %p216 = scmp.lt.s32.totalorder %s18, 0
      %s217 = scalar_select %p216, %s18, 0
      %s218 = smul.addr %s217, 4
      %s219 = scalar_lea.vmem %s1, %s218
      %p220 = scmp.lt.s32.totalorder %s18, 0
      %s221 = scalar_select %p220, %s18, 0
      %s222 = smul.addr %s221, 4
      %s223 = scalar_lea.vmem %s2, %s222
      %p224 = scmp.lt.s32.totalorder %s19, 1
      %s225 = scalar_select %p224, %s19, 1
      %p226 = scmp.lt.s32.totalorder %s18, 0
      %s227 = scalar_select %p226, %s18, 0
      %s228 = sadd.s32 %s227, %s225
      %s229 = smul.addr %s228, 4
      %s230 = scalar_lea.vmem %s3, %s229
      %v231 = vld [vmem:[%s215] sm:$0xf]
      %232 = vrot.lane.b32.xlu0 %v231, 127
      %v233 = vpop.permute.xlu0 %232
      %234 = vrot.lane.b32.xlu0 %v231, 1
      %v235 = vpop.permute.xlu0 %234
      %v236 = vlaneseq
      %v237 = vand.u32 %v236, 127
      %vm238 = vcmp.lt.s32.totalorder %v237, 0
      %v239 = vsub.s32 0, %v237
      %v240 = vsel %vm238, %v239, %v237
      %v241 = vshrl.u32 %v240, 1
      %v242 = vand.u32 %v240, 1
      %v243 = vsub.s32 0, %v242
      %v244 = vsel %vm238, %v243, %v242
      %vm245 = vcmp.ne.s32.totalorder %v244, 0
      %vm246 = vcmp.lt.s32.totalorder %v244, 0
      %vm247 = vmand %vm246, %vm245
      %v248 = vadd.s32 %v244, 2
      %v249 = vsel %vm247, %v248, %v244
      %vm250 = vcmp.eq.s32.totalorder %v249, 0
      %v251 = vsel %vm250, %v233, %v235
      %v252 = vld [vmem:[%s219] sm:$0xf]
      %v253 = vmul.f32 %v231, %v252
      %v254 = vld [vmem:[%s223] sm:$0xf]
      %v255 = vmul.f32 %v251, %v254
      %v256 = vadd.f32 %v253, %v255
      %257 = vst [vmem:[%s230] sm:$0xf] %v256
      %p258 = scmp.lt.s32.totalorder %s19, 1
      %s259 = scalar_select %p258, %s19, 1
      %p260 = scmp.lt.s32.totalorder %s18, 0
      %s261 = scalar_select %p260, %s18, 0
      %s262 = sadd.s32 %s261, %s259
      %s263 = smul.addr %s262, 4
      %s264 = scalar_lea.vmem %s3, %s263
      // Predicated region
      $region33: #{rotary_position_embedding.1} parent=31 // pred_check
        %p265 = pneg %p126
      $region34: #{rotary_position_embedding.1} parent=31 // pred_check_branch
        %267 = sbr.rel (%p265) target = $region36
      $region35: #{rotary_position_embedding.1} parent=31 // pred_region
        _
      $region36: #{rotary_position_embedding.1} parent=31 // pred_fallthru
        _
    $region32: #{rotary_position_embedding.1} parent=5 // pred_fallthru
      _
    %p268 = scmp.le.s32.totalorder 2, %s9
    // Predicated region
    $region37: #{rotary_position_embedding.1} parent=5 // pred_check
      %p269 = pneg %p268
    $region38: #{rotary_position_embedding.1} parent=5 // pred_check_branch
      %271 = sbr.rel (%p269) target = $region40
    $region39: #{rotary_position_embedding.1} parent=5 // pred_region
      %s272 = ssub.s32 %s9, 2
      // Predicated region
      $region41: #{rotary_position_embedding.1} parent=39 // pred_check
        %p273 = pneg %p132
      $region42: #{rotary_position_embedding.1} parent=39 // pred_check_branch
        %275 = sbr.rel (%p273) target = $region44
      $region43: #{rotary_position_embedding.1} parent=39 // pred_region
        %p276 = scmp.lt.s32.totalorder %s21, 1
        %s277 = scalar_select %p276, %s21, 1
        %p278 = scmp.lt.s32.totalorder %s20, 0
        %s279 = scalar_select %p278, %s20, 0
        %s280 = sadd.s32 %s279, %s277
        %s281 = smul.addr %s280, 4
        %s282 = scalar_lea.vmem %s3, %s281
      $region44: #{rotary_position_embedding.1} parent=39 // pred_fallthru
        _
    $region40: #{rotary_position_embedding.1} parent=5 // pred_fallthru
      _
  $region6: #{rotary_position_embedding.1} parent=0 // loop_footer
    %s13 = sadd.s32 1, %s9
  $region7: #{rotary_position_embedding.1} parent=0 // loop_footer_branch
    %8 = sbr.rel target = $region3
  $region8: #{rotary_position_embedding.1} parent=0 // loop_exit
    _

</llo_original>
